<compile_context>
chip_gen: v5e
topology: v5e:2x2
jax: 0.10.0
libtpu: 0.0.40
codegen_flags: <defaults>
</compile_context>

<pallas_src>
import functools

import jax
import jax.numpy as jnp
import numpy as np
from jax.experimental import pallas as pl
from jax.experimental.pallas import tpu as pltpu

_SMALL_N_FALLBACK = 256 * 1024  # below this, plain jnp beats kernel dispatch


def _chip_tuning():
    """(target block bytes per input, vmem_limit_bytes or None, min grid blocks)."""
    try:
        kind = jax.devices()[0].device_kind.lower()
    except Exception:
        kind = ""
    if "v7" in kind:
        # 6 MiB * 2 inputs * 2 buffers = 24 MiB; set the scoped limit explicitly.
        return 6 * 1024 * 1024, 30 * 1024 * 1024, 2
    if "v6" in kind:
        # 4 MiB * 2 * 2 = 16 MiB, fits the 32 MiB scoped default.
        return 4 * 1024 * 1024, None, 1
    # v5e / unknown: stay safely under the 16 MiB scoped VMEM default.
    return 2 * 1024 * 1024, None, 1


def _bce_elems(xh, xt, binary_targets):
    if binary_targets:
        # Hard 0/1 targets: one log per element instead of two (EUP relief).
        p = jnp.where(xt > 0.5, xh, 1.0 - xh)
        return -jnp.maximum(jnp.log(p), -100.0)
    log_p = jnp.maximum(jnp.log(xh), -100.0)
    log_1mp = jnp.maximum(jnp.log1p(-xh), -100.0)
    return -(xt * log_p + (1.0 - xt) * log_1mp)


def _bce_partial_kernel(xhat_ref, x_ref, out_ref, *, tile_r, total_rows,
                        num_blocks, binary_targets):
    """Per-block BCE partial sums, reduced over rows -> (1, cols) lane vector."""
    xh = xhat_ref[...].astype(jnp.float32)
    xt = x_ref[...].astype(jnp.float32)
    ragged = num_blocks * tile_r != total_rows

    def row_sum(a, b):
        return jnp.sum(_bce_elems(a, b, binary_targets), axis=0, keepdims=True)

    if not ragged:
        out_ref[...] = row_sum(xh, xt)
    else:
        j = pl.program_id(0)

        @pl.when(j < num_blocks - 1)
        def _():
            out_ref[...] = row_sum(xh, xt)

        @pl.when(j == num_blocks - 1)
        def _():
            # Rows past the true extent hold unspecified data (OOB read of the
            # last block). Substitute the BCE-neutral pair (1, 1) -> exactly 0.
            row = jax.lax.broadcasted_iota(jnp.int32, xh.shape, 0) + j * tile_r
            valid = row < total_rows
            out_ref[...] = row_sum(jnp.where(valid, xh, 1.0),
                                   jnp.where(valid, xt, 1.0))


def _bce_sum_jnp(x_hat, x):
    xh = x_hat.astype(jnp.float32)
    xt = x.astype(jnp.float32)
    log_p = jnp.maximum(jnp.log(xh), -100.0)
    log_1mp = jnp.maximum(jnp.log1p(-xh), -100.0)
    return jnp.sum(-(xt * log_p + (1.0 - xt) * log_1mp))


def _bce_sum_pallas(x_hat, x, *, binary_targets):
    n = int(np.prod(x_hat.shape))
    itemsize = jnp.dtype(x_hat.dtype).itemsize

    # Pick a 2-D view without any padding or copying (reshape is free for
    # contiguous row-major data).
    cols = None
    for c in (1024, 512, 256, 128):
        if n % c == 0:
            cols = c
            break
    if cols is not None:
        xh2d = x_hat.reshape(n // cols, cols)
        x2d = x.reshape(n // cols, cols)
    else:
        # Lane extent = full natural trailing dim (allowed even if % 128 != 0).
        last = x_hat.shape[-1] if x_hat.ndim >= 2 else n
        xh2d = x_hat.reshape(-1, last)
        x2d = x.reshape(-1, last)
        cols = last
    rows = xh2d.shape[0]

    target_bytes, vmem_limit, min_blocks = _chip_tuning()

    # If even the minimum-height block would blow the per-chip budget, bail out.
    if min(rows, 8) * cols * itemsize > target_bytes:
        # TODO(synk): extremely wide non-128-divisible rows; would need manual DMA tiling.
        return _bce_sum_jnp(x_hat, x)

    if rows <= 8:
        tile_r = rows  # block equals full array extent on the sublane dim
    else:
        target_rows = max(8, (target_bytes // (cols * itemsize)) // 8 * 8)
        tile_r = min(target_rows, (rows // 8) * 8)
        if min_blocks > 1:
            # v7x: guarantee >= 2 blocks so both TensorCores get work.
            cap = -(-rows // min_blocks)           # ceil(rows / min_blocks)
            cap = max(8, -(-cap // 8) * 8)         # round up to multiple of 8
            tile_r = min(tile_r, cap)
        tile_r = max(tile_r, 8)
    num_blocks = -(-rows // tile_r)

    kernel = functools.partial(
        _bce_partial_kernel, tile_r=tile_r, total_rows=rows,
        num_blocks=num_blocks, binary_targets=binary_targets)

    bytes_accessed = 2 * n * itemsize + num_blocks * cols * 4

    partials = pl.pallas_call(
        kernel,
        out_shape=jax.ShapeDtypeStruct((num_blocks, cols), jnp.float32),
        grid_spec=pltpu.PrefetchScalarGridSpec(
            num_scalar_prefetch=0,
            grid=(num_blocks,),
            in_specs=[
                pl.BlockSpec((tile_r, cols), lambda j: (j, 0)),
                pl.BlockSpec((tile_r, cols), lambda j: (j, 0)),
            ],
            out_specs=pl.BlockSpec((1, cols), lambda j: (j, 0)),
        ),
        compiler_params=pltpu.CompilerParams(
            dimension_semantics=("parallel",),
            vmem_limit_bytes=vmem_limit,
        ),
        cost_estimate=pl.CostEstimate(
            flops=int(6 * n),
            transcendentals=int((1 if binary_targets else 2) * n),
            bytes_accessed=int(bytes_accessed),
        ),
    )(xh2d, x2d)

    return jnp.sum(partials)


def binary_vae_loss(x_hat, x, mean, log_var, *, beta=1.0, binary_targets=False,
                    small_n_threshold=_SMALL_N_FALLBACK):
    """x_hat, x: same shape, x_hat in (0,1); mean, log_var: (B, Z). Scalar f32."""
    assert x_hat.shape == x.shape
    assert mean.shape == log_var.shape

    n = int(np.prod(x_hat.shape))
    if n < small_n_threshold:
        bce = _bce_sum_jnp(x_hat, x)
    else:
        bce = _bce_sum_pallas(x_hat, x, binary_targets=binary_targets)

    # KLD on the tiny (B, Z) latents: plain jnp, no kernel needed.
    m = mean.astype(jnp.float32)
    lv = log_var.astype(jnp.float32)
    kld = -0.5 * jnp.sum(1.0 + lv - m * m - jnp.exp(lv))

    return bce + jnp.float32(beta) * kld


def binary_vae_loss_ref(x_hat, x, mean, log_var, beta=1.0):
    log_p = jnp.maximum(jnp.log(x_hat), -100.0)
    log_1mp = jnp.maximum(jnp.log(1.0 - x_hat), -100.0)
    bce = jnp.sum(-(x * log_p + (1.0 - x) * log_1mp))
    kld = -0.5 * jnp.sum(1.0 + log_var - mean**2 - jnp.exp(log_var))
    return bce + beta * kld


def _make_inputs(key, B, D, Z):
    k1, k2, k3, k4 = jax.random.split(key, 4)
    x_hat = jax.nn.sigmoid(jax.random.normal(k1, (B, D), dtype=jnp.float32))
    x = jax.random.bernoulli(k2, 0.5, (B, D)).astype(jnp.float32)
    mean = jax.random.normal(k3, (B, Z), dtype=jnp.float32)
    log_var = 0.1 * jax.random.normal(k4, (B, Z), dtype=jnp.float32)
    return x_hat, x, mean, log_var


if __name__ == "__main__":
    key = jax.random.PRNGKey(0)

    # Primary small shape consistent with a LinearVAE on flattened 16x16 b/w images.
    B, D, Z = 2, 16 * 16, 32
    x_hat, x, mean, log_var = _make_inputs(key, B, D, Z)

    # Force the Pallas path at this tiny size so the kernel itself is exercised.
    loss = jax.block_until_ready(
        binary_vae_loss(x_hat, x, mean, log_var, beta=1.0, small_n_threshold=0))
    ref = binary_vae_loss_ref(x_hat, x, mean, log_var, beta=1.0)
    np.testing.assert_allclose(np.asarray(loss), np.asarray(ref), rtol=1e-5)

    # Extra coverage (all kernel paths):
    #   (B, D, beta, binary_targets, small_n_threshold-or-None-for-default)
    cases = [
        (16, 28 * 28, 0.5, False, 0),   # multi-block ragged grid, mask only in last block
        (2, 300, 2.0, False, 0),        # non-128-divisible lane extent, no padding copy
        (16, 28 * 28, 0.5, True, 0),    # single-log hard-binary-target path
        (64, 4096, 1.0, False, None),   # large enough for the default Pallas path
    ]
    for i, (B2, D2, beta2, bt, thr) in enumerate(cases):
        k = jax.random.fold_in(key, i + 1)
        xh2, x2, m2, lv2 = _make_inputs(k, B2, D2, Z)
        kwargs = dict(beta=beta2, binary_targets=bt)
        if thr is not None:
            kwargs["small_n_threshold"] = thr
        got = jax.block_until_ready(binary_vae_loss(xh2, x2, m2, lv2, **kwargs))
        want = binary_vae_loss_ref(xh2, x2, m2, lv2, beta=beta2)
        np.testing.assert_allclose(np.asarray(got), np.asarray(want), rtol=1e-5)

    # bf16 inputs stream at half the HBM bytes; compare against an f32 reference
    # computed on the same (bf16-rounded) values.
    kb = jax.random.fold_in(key, 99)
    xh_b, x_b, m_b, lv_b = _make_inputs(kb, 16, 28 * 28, Z)
    xh_b = xh_b.astype(jnp.bfloat16)
    x_b = x_b.astype(jnp.bfloat16)
    got = jax.block_until_ready(
        binary_vae_loss(xh_b, x_b, m_b, lv_b, beta=1.0, small_n_threshold=0))
    want = binary_vae_loss_ref(xh_b.astype(jnp.float32), x_b.astype(jnp.float32),
                               m_b, lv_b, beta=1.0)
    np.testing.assert_allclose(np.asarray(got), np.asarray(want), rtol=1e-4)

    print("KERNEL_OK")
</pallas_src>

<mosaic_0001>
module attributes {stable_mosaic.version = 11 : i64} {
  func.func @_bce_partial_kernel(%arg0: i32, %arg1: memref<1x512xf32, #tpu.memory_space<vmem>>, %arg2: memref<1x512xf32, #tpu.memory_space<vmem>>, %arg3: memref<1x512xf32, #tpu.memory_space<vmem>>) attributes {dimension_semantics = [#tpu.dimension_semantics<parallel>], iteration_bounds = array<i64: 1>, scalar_prefetch = 0 : i64, scratch_operands = 0 : i64, tpu.core_type = #tpu.core_type<tc>, window_params = [{transform_indices = @transform_0, window_bounds = array<i64: 1, 512>}, {transform_indices = @transform_1, window_bounds = array<i64: 1, 512>}, {transform_indices = @transform_2, window_bounds = array<i64: 1, 512>}]} {
    %c0 = arith.constant 0 : index
    %c0_0 = arith.constant 0 : index
    %0 = vector.load %arg1[%c0, %c0_0] : memref<1x512xf32, #tpu.memory_space<vmem>>, vector<1x512xf32>
    %c0_1 = arith.constant 0 : index
    %c0_2 = arith.constant 0 : index
    %1 = vector.load %arg2[%c0_1, %c0_2] : memref<1x512xf32, #tpu.memory_space<vmem>>, vector<1x512xf32>
    %2 = math.log %0 : vector<1x512xf32>
    %cst = arith.constant -1.000000e+02 : f32
    %3 = vector.broadcast %cst : f32 to vector<1x512xf32>
    %4 = arith.maximumf %2, %3 : vector<1x512xf32>
    %cst_3 = arith.constant 0.000000e+00 : f32
    %5 = vector.broadcast %cst_3 : f32 to vector<1x512xf32>
    %6 = arith.subf %5, %0 : vector<1x512xf32>
    %7 = math.log1p %6 : vector<1x512xf32>
    %cst_4 = arith.constant -1.000000e+02 : f32
    %8 = vector.broadcast %cst_4 : f32 to vector<1x512xf32>
    %9 = arith.maximumf %7, %8 : vector<1x512xf32>
    %10 = arith.mulf %1, %4 : vector<1x512xf32>
    %cst_5 = arith.constant 1.000000e+00 : f32
    %11 = vector.broadcast %cst_5 : f32 to vector<1x512xf32>
    %12 = arith.subf %11, %1 : vector<1x512xf32>
    %13 = arith.mulf %12, %9 : vector<1x512xf32>
    %14 = arith.addf %10, %13 : vector<1x512xf32>
    %cst_6 = arith.constant 0.000000e+00 : f32
    %15 = vector.broadcast %cst_6 : f32 to vector<1x512xf32>
    %16 = arith.subf %15, %14 : vector<1x512xf32>
    %cst_7 = arith.constant dense<0.000000e+00> : vector<512xf32>
    %17 = vector.multi_reduction <add>, %16, %cst_7 [0] : vector<1x512xf32> to vector<512xf32>
    %18 = vector.shape_cast %17 : vector<512xf32> to vector<1x512xf32>
    %c0_8 = arith.constant 0 : index
    %c0_9 = arith.constant 0 : index
    %19 = vector.load %arg3[%c0_8, %c0_9] : memref<1x512xf32, #tpu.memory_space<vmem>>, vector<1x512xf32>
    tpu.vector_store %arg3[%c0_8, %c0_9], %18 {strides = array<i32>} : memref<1x512xf32, #tpu.memory_space<vmem>>, vector<1x512xf32>,
    return
  }
  func.func @transform_0(%arg0: i32) -> (i32, i32) {
    %c0_i32 = arith.constant 0 : i32
    %c0_i32_0 = arith.constant 0 : i32
    return %arg0, %c0_i32 : i32, i32
  }
  func.func @transform_1(%arg0: i32) -> (i32, i32) {
    %c0_i32 = arith.constant 0 : i32
    %c0_i32_0 = arith.constant 0 : i32
    return %arg0, %c0_i32 : i32, i32
  }
  func.func @transform_2(%arg0: i32) -> (i32, i32) {
    %c0_i32 = arith.constant 0 : i32
    %c0_i32_0 = arith.constant 0 : i32
    return %arg0, %c0_i32 : i32, i32
  }
}

</mosaic_0001>

<llo_original>
// kernel: tpu_custom_call.1
$region0: #{tpu_custom_call.1}
  #allocation0 [shape = 'u32[]', space=smem, size = 0x4, offset = 0x4, fixed_abs, tag = 'smem constant byte address 0x4 - core index']
  #allocation1 [shape = 'u32[72,128]{1,0:T(1,128)}', space=vmem, size = 0x9000, scoped, tag = 'internal scratch']
  %s0 = inlined_call_operand.hbm [shape: f32[1,512], index: 0, kind: input, shape index: {}]
  %s1 = inlined_call_operand.hbm [shape: f32[1,512], index: 1, kind: input, shape index: {}]
  %s2 = inlined_call_operand.hbm [shape: f32[1,512], index: 2, kind: output, shape index: {}]
  %s3 = sld [smem:[#allocation0]]
  $region26: #{tpu_custom_call.1} parent=0
    _
  %s5 = ssub.s32 1, %s3
  %s6 = scalar_select 0, %s5, %s3
  $region1: #{tpu_custom_call.1} parent=0
    #allocation2 [shape = 'u8[2048]{0}', space=vmem, size = 0x800, scoped, tag = 'input window, operand 0, single buffered']
    #allocation3 [shape = 's32[1]{0}', space=sflag, size = 0x4, scoped, tag = 'scoped memory for tpu_custom_call.1']
    #allocation4 [shape = 's32[1]{0}', space=sflag, size = 0x4, scoped, tag = 'scoped memory for tpu_custom_call.1']
    #allocation5 [shape = 'u8[2048]{0}', space=vmem, size = 0x800, scoped, tag = 'input window, operand 1, single buffered']
    #allocation6 [shape = 's32[1]{0}', space=sflag, size = 0x4, scoped, tag = 'scoped memory for tpu_custom_call.1']
    #allocation7 [shape = 'u8[2048]{0}', space=vmem, size = 0x800, scoped, tag = 'output window, operand 0, single buffered']
    %7 = vsyncpa [#allocation3], 0
    %8 = vsyncpa [#allocation6], 0
    %9 = vsyncpa [#allocation4], 0
    // Predicated region
    $region2: #{tpu_custom_call.1} parent=1 // pred_check
      _
    $region3: #{tpu_custom_call.1} parent=1 // pred_check_branch
      %11 = sbr.rel (0) target = $region5
    $region4: #{tpu_custom_call.1} parent=1 // pred_region
      %13 = vsyncadd [#allocation3], 0
      %s15 = sshll.u32 %s0, 4
      %s16 = int_to_ptr.hbm [resolvable:$true] %s15
      %s17 = sshll.u32 [#allocation2], 4
      %s18 = int_to_ptr.vmem [resolvable:$true] %s17
      %20 = dma.hbm_to_vmem [thread:$0]  %s16, 64, %s18, [#allocation3]
    $region5: #{tpu_custom_call.1} parent=1 // pred_fallthru
      _
    // Predicated region
    $region6: #{tpu_custom_call.1} parent=1 // pred_check
      _
    $region7: #{tpu_custom_call.1} parent=1 // pred_check_branch
      %22 = sbr.rel (0) target = $region9
    $region8: #{tpu_custom_call.1} parent=1 // pred_region
      %24 = vsyncadd [#allocation6], 0
      %s26 = sshll.u32 %s1, 4
      %s27 = int_to_ptr.hbm [resolvable:$true] %s26
      %s28 = sshll.u32 [#allocation5], 4
      %s29 = int_to_ptr.vmem [resolvable:$true] %s28
      %31 = dma.hbm_to_vmem [thread:$0]  %s27, 64, %s29, [#allocation6]
    $region9: #{tpu_custom_call.1} parent=1 // pred_fallthru
      _
    // Predicated region
    $region10: #{tpu_custom_call.1} parent=1 // pred_check
      _
    $region11: #{tpu_custom_call.1} parent=1 // pred_check_branch
      %33 = sbr.rel (0) target = $region13
    $region12: #{tpu_custom_call.1} parent=1 // pred_region
      %35 = dma.done [#allocation3], 64
    $region13: #{tpu_custom_call.1} parent=1 // pred_fallthru
      _
    // Predicated region
    $region14: #{tpu_custom_call.1} parent=1 // pred_check
      _
    $region15: #{tpu_custom_call.1} parent=1 // pred_check_branch
      %37 = sbr.rel (0) target = $region17
    $region16: #{tpu_custom_call.1} parent=1 // pred_region
      %39 = dma.done [#allocation6], 64
    $region17: #{tpu_custom_call.1} parent=1 // pred_fallthru
      _
    %v40 = vld [vmem:[#allocation2] sm:$0xf]
    %v41 = vld [vmem:[#allocation5] sm:$0xf]
    %v42 = vlog2.pop %v40
    %v43 = vmul.f32 %v42, 0.6931472
    %v44 = vmax.f32 %v43, -100.0
    %v45 = vsub.f32 0.0, %v40
    %v46 = vadd.f32 %v45, 1.0
    %v47 = vlog2.pop %v46
    %v48 = vmul.f32 %v47, 0.6931472
    %v49 = vmul.f32 -0.5, %v45
    %v50 = vadd.f32 %v49, 1.0
    %v51 = vmul.f32 %v50, %v45
    %v52 = vand.u32 2147483647, %v45
    %vm53 = vcmp.lt.f32.partialorder %v52, 0.0004427343
    %v54 = vsel %vm53, %v51, %v48
    %v55 = vmax.f32 %v54, -100.0
    %v56 = vmul.f32 %v41, %v44
    %v57 = vsub.f32 1.0, %v41
    %v58 = vmul.f32 %v57, %v55
    %v59 = vadd.f32 %v56, %v58
    %v60 = vsub.f32 0.0, %v59
    %v61 = vadd.f32 %v60, 0.0
    %v62 = vlaneseq
    %vm63 = vcmp.ge.s32.totalorder %v62, 0
    %vm64 = vcmp.lt.s32.totalorder %v62, 512
    %vm65 = vmand %vm63, %vm64
    %66 = vst.msk [vmem:[#allocation7] sm:$0xf] %vm65, %v61
    // Predicated region
    $region18: #{tpu_custom_call.1} parent=1 // pred_check
      _
    $region19: #{tpu_custom_call.1} parent=1 // pred_check_branch
      %68 = sbr.rel (0) target = $region21
    $region20: #{tpu_custom_call.1} parent=1 // pred_region
      %70 = vsyncadd [#allocation4], 0
      %s72 = sshll.u32 [#allocation7], 4
      %s73 = int_to_ptr.vmem [resolvable:$true] %s72
      %s74 = sshll.u32 %s2, 4
      %s75 = int_to_ptr.hbm [resolvable:$true] %s74
      %77 = dma.vmem_to_hbm [thread:$0]  %s73, 64, %s75, [#allocation4]
    $region21: #{tpu_custom_call.1} parent=1 // pred_fallthru
      _
    // Predicated region
    $region22: #{tpu_custom_call.1} parent=1 // pred_check
      _
    $region23: #{tpu_custom_call.1} parent=1 // pred_check_branch
      %79 = sbr.rel (0) target = $region25
    $region24: #{tpu_custom_call.1} parent=1 // pred_region
      %81 = dma.done [#allocation4], 64
    $region25: #{tpu_custom_call.1} parent=1 // pred_fallthru
      _
    %82 = vsyncpa [#allocation3], 1
    %83 = vsyncpa [#allocation6], 1
    %84 = vsyncpa [#allocation4], 1

</llo_original>
